<compile_context>
chip_gen: v6e
topology: v6e:2x2x1
jax: 0.10.0
libtpu: 0.0.40
codegen_flags: <defaults>
</compile_context>

<pallas_src>
import functools

import jax
import jax.numpy as jnp
import numpy as np
from jax.experimental import pallas as pl
from jax.experimental.pallas import tpu as pltpu

BN_EPS = 1e-5


def _gblock_kernel(x_ref, w1_ref, w3_ref, p_ref, out_ref, *,
                   inv_count, img_h, img_w, n_chan):
    """All refs are full-array VMEM blocks (tiny problem, grid=(1,)).

    x_ref  : (R, L)     activations, R = N*H rows, L = W*C lanes
    w1_ref : (L, L)     1x1 conv weight, block-diagonal kron(I_W, W1[ci,co])
    w3_ref : (3, L, L)  3x3 conv weights, one (L,L) matrix per vertical tap ky
                        (the 3 horizontal taps folded in as off-block diags,
                         zeroed at the w borders)
    p_ref  : (4, L)     packed params: rows = b1, b3, gamma, beta (tiled over w)
    out_ref: (R, L)
    """
    R = x_ref.shape[0]
    x = x_ref[...]
    p = p_ref[...]
    b1 = p[0:1, :]
    b3 = p[1:2, :]
    gamma = p[2:3, :]
    beta = p[3:4, :]

    # In-kernel vertical border masks (no DMA): h index of each row.
    row = jax.lax.broadcasted_iota(jnp.int32, (R, 1), 0)
    if img_h & (img_h - 1) == 0:
        h_idx = jnp.bitwise_and(row, img_h - 1)
    else:
        h_idx = row % img_h
    mask_top = (h_idx > 0).astype(jnp.float32)          # zero at h == 0
    mask_bot = (h_idx < img_h - 1).astype(jnp.float32)  # zero at h == H-1

    # ---- branch 1: 1x1 conv = one full-width block-diagonal matmul ----
    x1 = jnp.dot(x, w1_ref[...], preferred_element_type=jnp.float32) + b1

    log2_w = img_w.bit_length() - 1  # W is a power of two

    def bn_relu(v):
        # One-pass per-channel batch stats over (N, H, W): sublane row-sums of
        # v and v*v, then log2(W) XLU rotate-and-add steps that sum over w and
        # broadcast the per-channel result back to every (w, c) lane.
        s = jnp.concatenate(
            [jnp.sum(v, axis=0, keepdims=True),
             jnp.sum(v * v, axis=0, keepdims=True)], axis=0)      # (2, L)
        for k in range(log2_w):
            s = s + pltpu.roll(s, shift=n_chan * (1 << k), axis=1)
        mean = s[0:1, :] * inv_count
        var = s[1:2, :] * inv_count - mean * mean
        scale = gamma * jax.lax.rsqrt(var + BN_EPS)
        return jnp.maximum(v * scale + (beta - mean * scale), 0.0)

    def conv3(v):
        # "same" 3x3 conv: vertical halo via XLU rolls + border masks, then
        # three chained f32-accumulating MXU dots (no VPU work between dots).
        v_up = mask_top * pltpu.roll(v, shift=1, axis=0)      # v[i-1], 0 at h==0
        v_dn = mask_bot * pltpu.roll(v, shift=R - 1, axis=0)  # v[i+1], 0 at h==H-1
        acc = jnp.dot(v, w3_ref[1], preferred_element_type=jnp.float32)
        acc = acc + jnp.dot(v_up, w3_ref[0], preferred_element_type=jnp.float32)
        acc = acc + jnp.dot(v_dn, w3_ref[2], preferred_element_type=jnp.float32)
        return acc

    # ---- branch 2: BN -> ReLU -> conv3 -> BN -> ReLU -> conv3 ----
    x2 = bn_relu(x)
    x2 = conv3(x2)            # bias omitted: exactly cancelled by next BN mean
    x2 = bn_relu(x2)
    x2 = conv3(x2) + b3

    out_ref[...] = x1 + x2


def prepare_gblock_constants(w1, b1, w3, b3, gamma, beta, W):
    """One-time (numpy) weight expansion — hoisted out of the per-call path."""
    w1 = np.asarray(w1, np.float32)
    w3 = np.asarray(w3, np.float32)
    C_out, C_in = w1.shape[0], w1.shape[1]
    assert C_out == C_in, "GBlock.forward requires in_channels == out_channels"
    C = C_in
    L = W * C

    # 1x1 conv weight (Cout, Cin, 1, 1) -> block-diagonal (L, L)
    w1m = np.transpose(w1[:, :, 0, 0], (1, 0))                     # (Cin, Cout)
    w1bd = np.kron(np.eye(W), w1m).astype(np.float32)              # (L, L)

    # 3x3 conv weight (Cout, Cin, 3, 3) -> per-ky (L, L) with the three
    # horizontal taps folded in as (off-)block-diagonals (zero at w borders).
    w3t = np.transpose(w3, (2, 3, 1, 0))                           # (ky,kx,ci,co)
    w3bd = np.stack([
        sum(np.kron(np.eye(W, k=-(kx - 1)), w3t[ky, kx]) for kx in range(3))
        for ky in range(3)
    ]).astype(np.float32)                                          # (3, L, L)

    # Packed parameter slab: rows = b1, b3, gamma, beta, each tiled over w.
    tile_w = lambda v: np.tile(np.asarray(v, np.float32), W).reshape(1, L)
    params = np.concatenate(
        [tile_w(b1), tile_w(b3), tile_w(gamma), tile_w(beta)], axis=0)  # (4, L)

    return jnp.asarray(w1bd), jnp.asarray(w3bd), jnp.asarray(params)


@jax.jit
def gblock_forward(x_nchw, w1bd, w3bd, params):
    """x_nchw: (N, C, H, W) float32 (PyTorch layout). Returns (N, C, H, W)."""
    N, C, H, W = x_nchw.shape
    assert W & (W - 1) == 0, "rotate-and-add BN reduce assumes power-of-two W"
    R, L = N * H, W * C
    f32 = jnp.float32

    # Lane-dense repack (done in XLA, not in the kernel): row=(n,h), lane=(w,c)
    x2d = jnp.transpose(x_nchw, (0, 2, 3, 1)).reshape(R, L)

    kernel = functools.partial(
        _gblock_kernel,
        inv_count=1.0 / float(N * H * W),
        img_h=H, img_w=W, n_chan=C)

    out2d = pl.pallas_call(
        kernel,
        out_shape=jax.ShapeDtypeStruct((R, L), f32),
        grid_spec=pltpu.PrefetchScalarGridSpec(
            num_scalar_prefetch=0,
            grid=(1,),
            in_specs=[
                pl.BlockSpec((R, L), lambda i: (0, 0)),        # x
                pl.BlockSpec((L, L), lambda i: (0, 0)),        # w1 block-diag
                pl.BlockSpec((3, L, L), lambda i: (0, 0, 0)),  # w3 per-ky
                pl.BlockSpec((4, L), lambda i: (0, 0)),        # param slab
            ],
            out_specs=pl.BlockSpec((R, L), lambda i: (0, 0)),
        ),
        compiler_params=pltpu.CompilerParams(
            dimension_semantics=("arbitrary",)),
    )(x2d, w1bd, w3bd, params)

    return jnp.transpose(out2d.reshape(N, H, W, C), (0, 3, 1, 2))


def gblock_reference(x, w1, b1, w3, b3, gamma, beta):
    """Pure-JAX reference (NCHW), mirrors the PyTorch forward."""
    C = x.shape[1]

    def bn(v):
        mean = jnp.mean(v, axis=(0, 2, 3), keepdims=True)
        var = jnp.mean((v - mean) ** 2, axis=(0, 2, 3), keepdims=True)
        g = gamma.reshape(1, C, 1, 1)
        b = beta.reshape(1, C, 1, 1)
        return (v - mean) * jax.lax.rsqrt(var + BN_EPS) * g + b

    def conv(v, w, b, pad):
        o = jax.lax.conv_general_dilated(
            v, w, window_strides=(1, 1), padding=[(pad, pad), (pad, pad)],
            dimension_numbers=("NCHW", "OIHW", "NCHW"),
            precision=jax.lax.Precision.HIGHEST)
        return o + b.reshape(1, -1, 1, 1)

    x1 = conv(x, w1, b1, 0)
    x2 = jnp.maximum(bn(x), 0.0)
    x2 = conv(x2, w3, b3, 1)
    x2 = jnp.maximum(bn(x2), 0.0)
    x2 = conv(x2, w3, b3, 1)
    return x1 + x2


if __name__ == "__main__":
    # Small shapes; W*C = 128 makes the kernel exactly lane-dense.  The PyTorch
    # module only runs when in_channels == out_channels (BN / conv3_1 are
    # re-applied to the conv output), so Cin = Cout = 8.
    N, C, H, W = 2, 8, 16, 16

    key = jax.random.PRNGKey(0)
    k_x, k_w1, k_b1, k_w3, k_b3, k_g, k_be = jax.random.split(key, 7)

    x = jax.random.normal(k_x, (N, C, H, W), jnp.float32)
    w1 = jax.random.normal(k_w1, (C, C, 1, 1), jnp.float32) * 0.2
    b1 = jax.random.normal(k_b1, (C,), jnp.float32) * 0.1
    w3 = jax.random.normal(k_w3, (C, C, 3, 3), jnp.float32) * 0.1
    b3 = jax.random.normal(k_b3, (C,), jnp.float32) * 0.1
    gamma = 1.0 + 0.1 * jax.random.normal(k_g, (C,), jnp.float32)
    beta = 0.1 * jax.random.normal(k_be, (C,), jnp.float32)

    # One-time weight expansion (kept out of the per-call jit path).
    w1bd, w3bd, params = prepare_gblock_constants(w1, b1, w3, b3, gamma, beta, W)
    jax.block_until_ready((w1bd, w3bd, params))

    out = jax.block_until_ready(gblock_forward(x, w1bd, w3bd, params))
    ref = jax.block_until_ready(
        gblock_reference(x, w1, b1, w3, b3, gamma, beta))

    np.testing.assert_allclose(np.asarray(out), np.asarray(ref),
                               rtol=2e-3, atol=2e-3)
    print("KERNEL_OK")
</pallas_src>

<mosaic_0001>
module attributes {stable_mosaic.version = 11 : i64} {
  func.func @_gblock_kernel(%arg0: i32, %arg1: memref<32x128xf32, #tpu.memory_space<vmem>>, %arg2: memref<128x128xf32, #tpu.memory_space<vmem>>, %arg3: memref<3x128x128xf32, #tpu.memory_space<vmem>>, %arg4: memref<4x128xf32, #tpu.memory_space<vmem>>, %arg5: memref<32x128xf32, #tpu.memory_space<vmem>>) attributes {dimension_semantics = [#tpu.dimension_semantics<arbitrary>], iteration_bounds = array<i64: 1>, scalar_prefetch = 0 : i64, scratch_operands = 0 : i64, tpu.core_type = #tpu.core_type<tc>, window_params = [{pipeline_mode = #tpu.pipeline_mode<synchronous>, transform_indices = @transform_0, window_bounds = array<i64: 32, 128>}, {pipeline_mode = #tpu.pipeline_mode<synchronous>, transform_indices = @transform_1, window_bounds = array<i64: 128, 128>}, {pipeline_mode = #tpu.pipeline_mode<synchronous>, transform_indices = @transform_2, window_bounds = array<i64: 3, 128, 128>}, {pipeline_mode = #tpu.pipeline_mode<synchronous>, transform_indices = @transform_3, window_bounds = array<i64: 4, 128>}, {pipeline_mode = #tpu.pipeline_mode<synchronous>, transform_indices = @transform_4, window_bounds = array<i64: 32, 128>}]} {
    %c0 = arith.constant 0 : index
    %c0_0 = arith.constant 0 : index
    %0 = vector.load %arg1[%c0, %c0_0] : memref<32x128xf32, #tpu.memory_space<vmem>>, vector<32x128xf32>
    %c0_1 = arith.constant 0 : index
    %c0_2 = arith.constant 0 : index
    %1 = vector.load %arg4[%c0_1, %c0_2] : memref<4x128xf32, #tpu.memory_space<vmem>>, vector<4x128xf32>
    %2 = vector.extract_strided_slice %1 {offsets = [0, 0], sizes = [1, 128], strides = [1, 1]} : vector<4x128xf32> to vector<1x128xf32>
    %3 = vector.extract_strided_slice %1 {offsets = [1, 0], sizes = [1, 128], strides = [1, 1]} : vector<4x128xf32> to vector<1x128xf32>
    %4 = vector.extract_strided_slice %1 {offsets = [2, 0], sizes = [1, 128], strides = [1, 1]} : vector<4x128xf32> to vector<1x128xf32>
    %5 = vector.extract_strided_slice %1 {offsets = [3, 0], sizes = [1, 128], strides = [1, 1]} : vector<4x128xf32> to vector<1x128xf32>
    %6 = tpu.iota {dimensions = array<i32: 0>} : vector<32x1xi32>
    %c15_i32 = arith.constant 15 : i32
    %7 = vector.broadcast %c15_i32 : i32 to vector<32x1xi32>
    %8 = arith.andi %6, %7 : vector<32x1xi32>
    %c0_i32 = arith.constant 0 : i32
    %9 = vector.broadcast %c0_i32 : i32 to vector<32x1xi32>
    %10 = arith.cmpi sgt, %8, %9 : vector<32x1xi32>
    %11 = arith.extui %10 : vector<32x1xi1> to vector<32x1xi32>
    %12 = arith.sitofp %11 : vector<32x1xi32> to vector<32x1xf32>
    %c15_i32_3 = arith.constant 15 : i32
    %13 = vector.broadcast %c15_i32_3 : i32 to vector<32x1xi32>
    %14 = arith.cmpi slt, %8, %13 : vector<32x1xi32>
    %15 = arith.extui %14 : vector<32x1xi1> to vector<32x1xi32>
    %16 = arith.sitofp %15 : vector<32x1xi32> to vector<32x1xf32>
    %c0_4 = arith.constant 0 : index
    %c0_5 = arith.constant 0 : index
    %17 = vector.load %arg2[%c0_4, %c0_5] : memref<128x128xf32, #tpu.memory_space<vmem>>, vector<128x128xf32>
    %cst = arith.constant dense<0.000000e+00> : vector<32x128xf32>
    %18 = tpu.matmul %0, %17, %cst {dimension_numbers = #tpu.dot_dimension_numbers<[1], [0], [0], [1], [0, 0, 1, 1], [], []>} : vector<32x128xf32>, vector<128x128xf32>, vector<32x128xf32> -> vector<32x128xf32>
    %19 = vector.broadcast %2 : vector<1x128xf32> to vector<32x128xf32>
    %20 = arith.addf %18, %19 : vector<32x128xf32>
    %cst_6 = arith.constant dense<0.000000e+00> : vector<128xf32>
    %21 = vector.multi_reduction <add>, %0, %cst_6 [0] : vector<32x128xf32> to vector<128xf32>
    %22 = vector.shape_cast %21 : vector<128xf32> to vector<1x128xf32>
    %23 = arith.mulf %0, %0 : vector<32x128xf32>
    %cst_7 = arith.constant dense<0.000000e+00> : vector<128xf32>
    %24 = vector.multi_reduction <add>, %23, %cst_7 [0] : vector<32x128xf32> to vector<128xf32>
    %25 = vector.shape_cast %24 : vector<128xf32> to vector<1x128xf32>
    %26 = tpu.concatenate %22, %25 in 0 : vector<1x128xf32>, vector<1x128xf32> -> vector<2x128xf32>
    %c8_i32 = arith.constant 8 : i32
    %27 = tpu.dynamic_rotate %26 by %c8_i32 dim 1 : vector<2x128xf32>, i32 -> vector<2x128xf32>
    %28 = arith.addf %26, %27 : vector<2x128xf32>
    %c16_i32 = arith.constant 16 : i32
    %29 = tpu.dynamic_rotate %28 by %c16_i32 dim 1 : vector<2x128xf32>, i32 -> vector<2x128xf32>
    %30 = arith.addf %28, %29 : vector<2x128xf32>
    %c32_i32 = arith.constant 32 : i32
    %31 = tpu.dynamic_rotate %30 by %c32_i32 dim 1 : vector<2x128xf32>, i32 -> vector<2x128xf32>
    %32 = arith.addf %30, %31 : vector<2x128xf32>
    %c64_i32 = arith.constant 64 : i32
    %33 = tpu.dynamic_rotate %32 by %c64_i32 dim 1 : vector<2x128xf32>, i32 -> vector<2x128xf32>
    %34 = arith.addf %32, %33 : vector<2x128xf32>
    %35 = vector.extract_strided_slice %34 {offsets = [0, 0], sizes = [1, 128], strides = [1, 1]} : vector<2x128xf32> to vector<1x128xf32>
    %cst_8 = arith.constant 0.001953125 : f32
    %36 = vector.broadcast %cst_8 : f32 to vector<1x128xf32>
    %37 = arith.mulf %35, %36 : vector<1x128xf32>
    %38 = vector.extract_strided_slice %34 {offsets = [1, 0], sizes = [1, 128], strides = [1, 1]} : vector<2x128xf32> to vector<1x128xf32>
    %cst_9 = arith.constant 0.001953125 : f32
    %39 = vector.broadcast %cst_9 : f32 to vector<1x128xf32>
    %40 = arith.mulf %38, %39 : vector<1x128xf32>
    %41 = arith.mulf %37, %37 : vector<1x128xf32>
    %42 = arith.subf %40, %41 : vector<1x128xf32>
    %cst_10 = arith.constant 9.99999974E-6 : f32
    %43 = vector.broadcast %cst_10 : f32 to vector<1x128xf32>
    %44 = arith.addf %42, %43 : vector<1x128xf32>
    %45 = math.rsqrt %44 : vector<1x128xf32>
    %46 = arith.mulf %4, %45 : vector<1x128xf32>
    %47 = vector.broadcast %46 : vector<1x128xf32> to vector<32x128xf32>
    %48 = arith.mulf %0, %47 : vector<32x128xf32>
    %49 = arith.mulf %37, %46 : vector<1x128xf32>
    %50 = arith.subf %5, %49 : vector<1x128xf32>
    %51 = vector.broadcast %50 : vector<1x128xf32> to vector<32x128xf32>
    %52 = arith.addf %48, %51 : vector<32x128xf32>
    %cst_11 = arith.constant 0.000000e+00 : f32
    %53 = vector.broadcast %cst_11 : f32 to vector<32x128xf32>
    %54 = arith.maximumf %52, %53 : vector<32x128xf32>
    %c1_i32 = arith.constant 1 : i32
    %55 = tpu.dynamic_rotate %54 by %c1_i32 dim 0 : vector<32x128xf32>, i32 -> vector<32x128xf32>
    %56 = vector.broadcast %12 : vector<32x1xf32> to vector<32x128xf32>
    %57 = arith.mulf %56, %55 : vector<32x128xf32>
    %c31_i32 = arith.constant 31 : i32
    %58 = tpu.dynamic_rotate %54 by %c31_i32 dim 0 : vector<32x128xf32>, i32 -> vector<32x128xf32>
    %59 = vector.broadcast %16 : vector<32x1xf32> to vector<32x128xf32>
    %60 = arith.mulf %59, %58 : vector<32x128xf32>
    %c1 = arith.constant 1 : index
    %c0_12 = arith.constant 0 : index
    %c0_13 = arith.constant 0 : index
    %61 = vector.load %arg3[%c1, %c0_12, %c0_13] : memref<3x128x128xf32, #tpu.memory_space<vmem>>, vector<1x128x128xf32>
    %62 = vector.shape_cast %61 : vector<1x128x128xf32> to vector<128x128xf32>
    %cst_14 = arith.constant dense<0.000000e+00> : vector<32x128xf32>
    %63 = tpu.matmul %54, %62, %cst_14 {dimension_numbers = #tpu.dot_dimension_numbers<[1], [0], [0], [1], [0, 0, 1, 1], [], []>} : vector<32x128xf32>, vector<128x128xf32>, vector<32x128xf32> -> vector<32x128xf32>
    %c0_15 = arith.constant 0 : index
    %c0_16 = arith.constant 0 : index
    %c0_17 = arith.constant 0 : index
    %64 = vector.load %arg3[%c0_15, %c0_16, %c0_17] : memref<3x128x128xf32, #tpu.memory_space<vmem>>, vector<1x128x128xf32>
    %65 = vector.shape_cast %64 : vector<1x128x128xf32> to vector<128x128xf32>
    %cst_18 = arith.constant dense<0.000000e+00> : vector<32x128xf32>
    %66 = tpu.matmul %57, %65, %cst_18 {dimension_numbers = #tpu.dot_dimension_numbers<[1], [0], [0], [1], [0, 0, 1, 1], [], []>} : vector<32x128xf32>, vector<128x128xf32>, vector<32x128xf32> -> vector<32x128xf32>
    %67 = arith.addf %63, %66 : vector<32x128xf32>
    %c2 = arith.constant 2 : index
    %c0_19 = arith.constant 0 : index
    %c0_20 = arith.constant 0 : index
    %68 = vector.load %arg3[%c2, %c0_19, %c0_20] : memref<3x128x128xf32, #tpu.memory_space<vmem>>, vector<1x128x128xf32>
    %69 = vector.shape_cast %68 : vector<1x128x128xf32> to vector<128x128xf32>
    %cst_21 = arith.constant dense<0.000000e+00> : vector<32x128xf32>
    %70 = tpu.matmul %60, %69, %cst_21 {dimension_numbers = #tpu.dot_dimension_numbers<[1], [0], [0], [1], [0, 0, 1, 1], [], []>} : vector<32x128xf32>, vector<128x128xf32>, vector<32x128xf32> -> vector<32x128xf32>
    %71 = arith.addf %67, %70 : vector<32x128xf32>
    %cst_22 = arith.constant dense<0.000000e+00> : vector<128xf32>
    %72 = vector.multi_reduction <add>, %71, %cst_22 [0] : vector<32x128xf32> to vector<128xf32>
    %73 = vector.shape_cast %72 : vector<128xf32> to vector<1x128xf32>
    %74 = arith.mulf %71, %71 : vector<32x128xf32>
    %cst_23 = arith.constant dense<0.000000e+00> : vector<128xf32>
    %75 = vector.multi_reduction <add>, %74, %cst_23 [0] : vector<32x128xf32> to vector<128xf32>
    %76 = vector.shape_cast %75 : vector<128xf32> to vector<1x128xf32>
    %77 = tpu.concatenate %73, %76 in 0 : vector<1x128xf32>, vector<1x128xf32> -> vector<2x128xf32>
    %c8_i32_24 = arith.constant 8 : i32
    %78 = tpu.dynamic_rotate %77 by %c8_i32_24 dim 1 : vector<2x128xf32>, i32 -> vector<2x128xf32>
    %79 = arith.addf %77, %78 : vector<2x128xf32>
    %c16_i32_25 = arith.constant 16 : i32
    %80 = tpu.dynamic_rotate %79 by %c16_i32_25 dim 1 : vector<2x128xf32>, i32 -> vector<2x128xf32>
    %81 = arith.addf %79, %80 : vector<2x128xf32>
    %c32_i32_26 = arith.constant 32 : i32
    %82 = tpu.dynamic_rotate %81 by %c32_i32_26 dim 1 : vector<2x128xf32>, i32 -> vector<2x128xf32>
    %83 = arith.addf %81, %82 : vector<2x128xf32>
    %c64_i32_27 = arith.constant 64 : i32
    %84 = tpu.dynamic_rotate %83 by %c64_i32_27 dim 1 : vector<2x128xf32>, i32 -> vector<2x128xf32>
    %85 = arith.addf %83, %84 : vector<2x128xf32>
    %86 = vector.extract_strided_slice %85 {offsets = [0, 0], sizes = [1, 128], strides = [1, 1]} : vector<2x128xf32> to vector<1x128xf32>
    %cst_28 = arith.constant 0.001953125 : f32
    %87 = vector.broadcast %cst_28 : f32 to vector<1x128xf32>
    %88 = arith.mulf %86, %87 : vector<1x128xf32>
    %89 = vector.extract_strided_slice %85 {offsets = [1, 0], sizes = [1, 128], strides = [1, 1]} : vector<2x128xf32> to vector<1x128xf32>
    %cst_29 = arith.constant 0.001953125 : f32
    %90 = vector.broadcast %cst_29 : f32 to vector<1x128xf32>
    %91 = arith.mulf %89, %90 : vector<1x128xf32>
    %92 = arith.mulf %88, %88 : vector<1x128xf32>
    %93 = arith.subf %91, %92 : vector<1x128xf32>
    %cst_30 = arith.constant 9.99999974E-6 : f32
    %94 = vector.broadcast %cst_30 : f32 to vector<1x128xf32>
    %95 = arith.addf %93, %94 : vector<1x128xf32>
    %96 = math.rsqrt %95 : vector<1x128xf32>
    %97 = arith.mulf %4, %96 : vector<1x128xf32>
    %98 = vector.broadcast %97 : vector<1x128xf32> to vector<32x128xf32>
    %99 = arith.mulf %71, %98 : vector<32x128xf32>
    %100 = arith.mulf %88, %97 : vector<1x128xf32>
    %101 = arith.subf %5, %100 : vector<1x128xf32>
    %102 = vector.broadcast %101 : vector<1x128xf32> to vector<32x128xf32>
    %103 = arith.addf %99, %102 : vector<32x128xf32>
    %cst_31 = arith.constant 0.000000e+00 : f32
    %104 = vector.broadcast %cst_31 : f32 to vector<32x128xf32>
    %105 = arith.maximumf %103, %104 : vector<32x128xf32>
    %c1_i32_32 = arith.constant 1 : i32
    %106 = tpu.dynamic_rotate %105 by %c1_i32_32 dim 0 : vector<32x128xf32>, i32 -> vector<32x128xf32>
    %107 = vector.broadcast %12 : vector<32x1xf32> to vector<32x128xf32>
    %108 = arith.mulf %107, %106 : vector<32x128xf32>
    %c31_i32_33 = arith.constant 31 : i32
    %109 = tpu.dynamic_rotate %105 by %c31_i32_33 dim 0 : vector<32x128xf32>, i32 -> vector<32x128xf32>
    %110 = vector.broadcast %16 : vector<32x1xf32> to vector<32x128xf32>
    %111 = arith.mulf %110, %109 : vector<32x128xf32>
    %c1_34 = arith.constant 1 : index
    %c0_35 = arith.constant 0 : index
    %c0_36 = arith.constant 0 : index
    %112 = vector.load %arg3[%c1_34, %c0_35, %c0_36] : memref<3x128x128xf32, #tpu.memory_space<vmem>>, vector<1x128x128xf32>
    %113 = vector.shape_cast %112 : vector<1x128x128xf32> to vector<128x128xf32>
    %cst_37 = arith.constant dense<0.000000e+00> : vector<32x128xf32>
    %114 = tpu.matmul %105, %113, %cst_37 {dimension_numbers = #tpu.dot_dimension_numbers<[1], [0], [0], [1], [0, 0, 1, 1], [], []>} : vector<32x128xf32>, vector<128x128xf32>, vector<32x128xf32> -> vector<32x128xf32>
    %c0_38 = arith.constant 0 : index
    %c0_39 = arith.constant 0 : index
    %c0_40 = arith.constant 0 : index
    %115 = vector.load %arg3[%c0_38, %c0_39, %c0_40] : memref<3x128x128xf32, #tpu.memory_space<vmem>>, vector<1x128x128xf32>
    %116 = vector.shape_cast %115 : vector<1x128x128xf32> to vector<128x128xf32>
    %cst_41 = arith.constant dense<0.000000e+00> : vector<32x128xf32>
    %117 = tpu.matmul %108, %116, %cst_41 {dimension_numbers = #tpu.dot_dimension_numbers<[1], [0], [0], [1], [0, 0, 1, 1], [], []>} : vector<32x128xf32>, vector<128x128xf32>, vector<32x128xf32> -> vector<32x128xf32>
    %118 = arith.addf %114, %117 : vector<32x128xf32>
    %c2_42 = arith.constant 2 : index
    %c0_43 = arith.constant 0 : index
    %c0_44 = arith.constant 0 : index
    %119 = vector.load %arg3[%c2_42, %c0_43, %c0_44] : memref<3x128x128xf32, #tpu.memory_space<vmem>>, vector<1x128x128xf32>
    %120 = vector.shape_cast %119 : vector<1x128x128xf32> to vector<128x128xf32>
    %cst_45 = arith.constant dense<0.000000e+00> : vector<32x128xf32>
    %121 = tpu.matmul %111, %120, %cst_45 {dimension_numbers = #tpu.dot_dimension_numbers<[1], [0], [0], [1], [0, 0, 1, 1], [], []>} : vector<32x128xf32>, vector<128x128xf32>, vector<32x128xf32> -> vector<32x128xf32>
    %122 = arith.addf %118, %121 : vector<32x128xf32>
    %123 = vector.broadcast %3 : vector<1x128xf32> to vector<32x128xf32>
    %124 = arith.addf %122, %123 : vector<32x128xf32>
    %125 = arith.addf %20, %124 : vector<32x128xf32>
    %c0_46 = arith.constant 0 : index
    %c0_47 = arith.constant 0 : index
    %126 = vector.load %arg5[%c0_46, %c0_47] : memref<32x128xf32, #tpu.memory_space<vmem>>, vector<32x128xf32>
    tpu.vector_store %arg5[%c0_46, %c0_47], %125 {strides = array<i32>} : memref<32x128xf32, #tpu.memory_space<vmem>>, vector<32x128xf32>,
    return
  }
  func.func @transform_0(%arg0: i32) -> (i32, i32) {
    %c0_i32 = arith.constant 0 : i32
    %c0_i32_0 = arith.constant 0 : i32
    %c0_i32_1 = arith.constant 0 : i32
    return %c0_i32, %c0_i32_0 : i32, i32
  }
  func.func @transform_1(%arg0: i32) -> (i32, i32) {
    %c0_i32 = arith.constant 0 : i32
    %c0_i32_0 = arith.constant 0 : i32
    %c0_i32_1 = arith.constant 0 : i32
    return %c0_i32, %c0_i32_0 : i32, i32
  }
  func.func @transform_2(%arg0: i32) -> (i32, i32, i32) {
    %c0_i32 = arith.constant 0 : i32
    %c0_i32_0 = arith.constant 0 : i32
    %c0_i32_1 = arith.constant 0 : i32
    %c0_i32_2 = arith.constant 0 : i32
    return %c0_i32, %c0_i32_0, %c0_i32_1 : i32, i32, i32
  }
  func.func @transform_3(%arg0: i32) -> (i32, i32) {
    %c0_i32 = arith.constant 0 : i32
    %c0_i32_0 = arith.constant 0 : i32
    %c0_i32_1 = arith.constant 0 : i32
    return %c0_i32, %c0_i32_0 : i32, i32
  }
  func.func @transform_4(%arg0: i32) -> (i32, i32) {
    %c0_i32 = arith.constant 0 : i32
    %c0_i32_0 = arith.constant 0 : i32
    %c0_i32_1 = arith.constant 0 : i32
    return %c0_i32, %c0_i32_0 : i32, i32
  }
}

</mosaic_0001>

<llo_original>
// kernel: gblock_forward.1
$region0: #{gblock_forward.1}
  #allocation0 [shape = 'u32[]', space=smem, size = 0x4, offset = 0x4, fixed_abs, tag = 'smem constant byte address 0x4 - core index']
  #allocation1 [shape = 'u32[144,128]{1,0:T(1,128)}', space=vmem, size = 0x12000, scoped, tag = 'internal scratch']
  %s0 = inlined_call_operand.vmem [shape: f32[32,128], index: 0, kind: input, shape index: {}]
  %s1 = inlined_call_operand.vmem [shape: f32[128,128], index: 1, kind: input, shape index: {}]
  %s2 = inlined_call_operand.vmem [shape: f32[3,128,128], index: 2, kind: input, shape index: {}]
  %s3 = inlined_call_operand.vmem [shape: f32[4,128], index: 3, kind: input, shape index: {}]
  %s4 = inlined_call_operand.vmem [shape: f32[32,128], index: 4, kind: output, shape index: {}]
  %s5 = sld [smem:[#allocation0]]
  $region26: #{gblock_forward.1} parent=0
    _
  %s7 = ssub.s32 1, %s5
  %s8 = scalar_select 0, %s7, %s5
  // Predicated region
  $region2: #{gblock_forward.1} parent=0 // pred_check
    _
  $region3: #{gblock_forward.1} parent=0 // pred_check_branch
    %10 = sbr.rel (0) target = $region5
  $region4: #{gblock_forward.1} parent=0 // pred_region
    _
  $region5: #{gblock_forward.1} parent=0 // pred_fallthru
    _
  // Predicated region
  $region6: #{gblock_forward.1} parent=0 // pred_check
    _
  $region7: #{gblock_forward.1} parent=0 // pred_check_branch
    %12 = sbr.rel (0) target = $region9
  $region8: #{gblock_forward.1} parent=0 // pred_region
    _
  $region9: #{gblock_forward.1} parent=0 // pred_fallthru
    _
  // Predicated region
  $region10: #{gblock_forward.1} parent=0 // pred_check
    _
  $region11: #{gblock_forward.1} parent=0 // pred_check_branch
    %14 = sbr.rel (0) target = $region13
  $region12: #{gblock_forward.1} parent=0 // pred_region
    _
  $region13: #{gblock_forward.1} parent=0 // pred_fallthru
    _
  // Predicated region
  $region14: #{gblock_forward.1} parent=0 // pred_check
    _
  $region15: #{gblock_forward.1} parent=0 // pred_check_branch
    %16 = sbr.rel (0) target = $region17
  $region16: #{gblock_forward.1} parent=0 // pred_region
    _
  $region17: #{gblock_forward.1} parent=0 // pred_fallthru
    _
  %v17 = vld [vmem:[%s0] sm:$0xff]
  %v18 = vld [vmem:[%s0 + $0x8] sm:$0xff]
  %v19 = vld [vmem:[%s0 + $0x10] sm:$0xff]
  %v20 = vld [vmem:[%s0 + $0x18] sm:$0xff]
  %v21 = vld [vmem:[%s3] sm:$0xf]
  %v22 = vlaneseq
  %v23 = vshrl.u32 %v22, 7
  %v24 = vadd.s32 %v23, 8
  %v25 = vadd.s32 %v23, 16
  %v26 = vadd.s32 %v23, 24
  %v27 = vand.u32 %v23, 15
  %v28 = vand.u32 %v24, 15
  %v29 = vand.u32 %v25, 15
  %v30 = vand.u32 %v26, 15
  %vm31 = vcmp.gt.s32.totalorder %v27, 0
  %vm32 = vcmp.gt.s32.totalorder %v28, 0
  %vm33 = vcmp.gt.s32.totalorder %v29, 0
  %vm34 = vcmp.gt.s32.totalorder %v30, 0
  %v35 = vsel %vm31, 1, 0
  %v36 = vsel %vm32, 1, 0
  %v37 = vsel %vm33, 1, 0
  %v38 = vsel %vm34, 1, 0
  %v39 = vcvt.s32.f32 %v35
  %v40 = vcvt.s32.f32 %v36
  %v41 = vcvt.s32.f32 %v37
  %v42 = vcvt.s32.f32 %v38
  %vm43 = vcmp.lt.s32.totalorder %v27, 15
  %vm44 = vcmp.lt.s32.totalorder %v28, 15
  %vm45 = vcmp.lt.s32.totalorder %v29, 15
  %vm46 = vcmp.lt.s32.totalorder %v30, 15
  %v47 = vsel %vm43, 1, 0
  %v48 = vsel %vm44, 1, 0
  %v49 = vsel %vm45, 1, 0
  %v50 = vsel %vm46, 1, 0
  %v51 = vcvt.s32.f32 %v47
  %v52 = vcvt.s32.f32 %v48
  %v53 = vcvt.s32.f32 %v49
  %v54 = vcvt.s32.f32 %v50
  %v55 = vld [vmem:[%s1] sm:$0xff]
  %v56 = vld [vmem:[%s1 + $0x8] sm:$0xff]
  %v57 = vld [vmem:[%s1 + $0x10] sm:$0xff]
  %v58 = vld [vmem:[%s1 + $0x18] sm:$0xff]
  %v59 = vld [vmem:[%s1 + $0x20] sm:$0xff]
  %v60 = vld [vmem:[%s1 + $0x28] sm:$0xff]
  %v61 = vld [vmem:[%s1 + $0x30] sm:$0xff]
  %v62 = vld [vmem:[%s1 + $0x38] sm:$0xff]
  %v63 = vld [vmem:[%s1 + $0x40] sm:$0xff]
  %v64 = vld [vmem:[%s1 + $0x48] sm:$0xff]
  %v65 = vld [vmem:[%s1 + $0x50] sm:$0xff]
  %v66 = vld [vmem:[%s1 + $0x58] sm:$0xff]
  %v67 = vld [vmem:[%s1 + $0x60] sm:$0xff]
  %v68 = vld [vmem:[%s1 + $0x68] sm:$0xff]
  %v69 = vld [vmem:[%s1 + $0x70] sm:$0xff]
  %v70 = vld [vmem:[%s1 + $0x78] sm:$0xff]
  %v71 = vlaneseq
  %v72 = vshrl.u32 %v71, 7
  %v73 = vsub.s32 0, %v72
  %v74 = vrot.slane %v21, %v73
  %75 = vmatprep.subr.mxu0 0.0
  %76 = vmatpush1.msra.mxu0 %v70
  %77 = vmatprep.subr.mxu0 0.0
  %78 = vmatpush1.msra.mxu0 %v69
  %79 = vmatprep.subr.mxu0 0.0
  %80 = vmatpush1.msra.mxu0 %v68
  %81 = vmatprep.subr.mxu0 0.0
  %82 = vmatpush1.msra.mxu0 %v67
  %83 = vmatprep.subr.mxu0 0.0
  %84 = vmatpush1.msra.mxu0 %v66
  %85 = vmatprep.subr.mxu0 0.0
  %86 = vmatpush1.msra.mxu0 %v65
  %87 = vmatprep.subr.mxu0 0.0
  %88 = vmatpush1.msra.mxu0 %v64
  %89 = vmatprep.subr.mxu0 0.0
  %90 = vmatpush1.msra.mxu0 %v63
  %91 = vmatprep.subr.mxu0 0.0
  %92 = vmatpush1.msra.mxu0 %v62
  %93 = vmatprep.subr.mxu0 0.0
  %94 = vmatpush1.msra.mxu0 %v61
  %95 = vmatprep.subr.mxu0 0.0
  %96 = vmatpush1.msra.mxu0 %v60
  %97 = vmatprep.subr.mxu0 0.0
  %98 = vmatpush1.msra.mxu0 %v59
  %99 = vmatprep.subr.mxu0 0.0
  %100 = vmatpush1.msra.mxu0 %v58
  %101 = vmatprep.subr.mxu0 0.0
  %102 = vmatpush1.msra.mxu0 %v57
  %103 = vmatprep.subr.mxu0 0.0
  %104 = vmatpush1.msra.mxu0 %v56
  %105 = vmatprep.subr.mxu0 0.0
  %106 = vmatpush1.msra.mxu0 %v55
  %107 = vmatprep.subr.mxu0 0.0
  %108 = vmatpush2.msra.mxu0 0.0
  %109 = vmatprep.subr.mxu0 0.0
  %110 = vmatpush2.msra.mxu0 0.0
  %111 = vmatprep.subr.mxu0 0.0
  %112 = vmatpush2.msra.mxu0 0.0
  %113 = vmatprep.subr.mxu0 0.0
  %114 = vmatpush2.msra.mxu0 0.0
  %115 = vmatprep.subr.mxu0 0.0
  %116 = vmatpush2.msra.mxu0 0.0
  %117 = vmatprep.subr.mxu0 0.0
  %118 = vmatpush2.msra.mxu0 0.0
  %119 = vmatprep.subr.mxu0 0.0
  %120 = vmatpush2.msra.mxu0 0.0
  %121 = vmatprep.subr.mxu0 0.0
  %122 = vmatpush2.msra.mxu0 0.0
  %123 = vmatprep.subr.mxu0 0.0
  %124 = vmatpush2.msra.mxu0 0.0
  %125 = vmatprep.subr.mxu0 0.0
  %126 = vmatpush2.msra.mxu0 0.0
  %127 = vmatprep.subr.mxu0 0.0
  %128 = vmatpush2.msra.mxu0 0.0
  %129 = vmatprep.subr.mxu0 0.0
  %130 = vmatpush2.msra.mxu0 0.0
  %131 = vmatprep.subr.mxu0 0.0
  %132 = vmatpush2.msra.mxu0 0.0
  %133 = vmatprep.subr.mxu0 0.0
  %134 = vmatpush2.msra.mxu0 0.0
  %135 = vmatprep.subr.mxu0 0.0
  %136 = vmatpush2.msra.mxu0 0.0
  %137 = vmatprep.subr.mxu0 0.0
  %138 = vmatpush2.msra.mxu0 0.0
  %139 = vmatprep.mubr.f32.mxu0 0.0
  %140 = vmatmul.mubr.f32.gmra.mxu0 %v17
  %v141 = vpop.f32.mrf.mxu0
  %v142 = vadd.f32 %v74, %v141
  %v143 = vpop.f32.mrf.mxu0
  %144 = vmatprep.mubr.f32.mxu0 0.0
  %145 = vmatmul.mubr.f32.gmra.mxu0 %v18
  %v146 = vpop.f32.mrf.mxu0
  %v147 = vadd.f32 %v74, %v146
  %v148 = vpop.f32.mrf.mxu0
  %149 = vmatprep.mubr.f32.mxu0 0.0
  %150 = vmatmul.mubr.f32.gmra.mxu0 %v19
  %v151 = vpop.f32.mrf.mxu0
  %v152 = vadd.f32 %v74, %v151
  %v153 = vpop.f32.mrf.mxu0
  %154 = vmatprep.mubr.f32.mxu0 0.0
  %155 = vmatmul.mubr.f32.gmra.mxu0 %v20
  %v156 = vpop.f32.mrf.mxu0
  %v157 = vadd.f32 %v74, %v156
  %v158 = vpop.f32.mrf.mxu0
  %159 = vdwg.mxu0
  %v160 = vadd.f32 %v17, %v18
  %v161 = vadd.f32 %v160, %v19
  %v162 = vadd.f32 %v161, %v20
  %v163 = vrot.slane %v162, 4
  %v164 = vadd.f32 %v162, %v163
  %v165 = vrot.slane %v164, 2
  %v166 = vadd.f32 %v164, %v165
  %v167 = vrot.slane %v166, 1
  %v168 = vadd.f32 %v166, %v167
  %v169 = vmul.f32 %v17, %v17
  %v170 = vmul.f32 %v18, %v18
  %v171 = vmul.f32 %v19, %v19
  %v172 = vmul.f32 %v20, %v20
  %v173 = vadd.f32 %v169, %v170
  %v174 = vadd.f32 %v173, %v171
  %v175 = vadd.f32 %v174, %v172
  %v176 = vrot.slane %v175, 4
  %v177 = vadd.f32 %v175, %v176
  %v178 = vrot.slane %v177, 2
  %v179 = vadd.f32 %v177, %v178
  %v180 = vrot.slane %v179, 1
  %v181 = vadd.f32 %v179, %v180
  %vm182 = vcmask 1040384
  %v183 = vsel %vm182, %v168, %v181
  %184 = vrot.lane.b32.xlu0 %v183, 8
  %v185 = vpop.permute.xlu0 %184
  %v186 = vadd.f32 %v183, %v185
  %187 = vrot.lane.b32.xlu0 %v186, 16
  %v188 = vpop.permute.xlu0 %187
  %v189 = vadd.f32 %v186, %v188
  %190 = vrot.lane.b32.xlu0 %v189, 32
  %v191 = vpop.permute.xlu0 %190
  %v192 = vadd.f32 %v189, %v191
  %193 = vrot.lane.b32.xlu0 %v192, 64
  %v194 = vpop.permute.xlu0 %193
  %v195 = vadd.f32 %v192, %v194
  %v196 = vmul.f32 %v195, 0.001953125
  %v197 = vmul.f32 %v196, %v196
  %v199 = vrot.slane %v197, 7
  %v201 = vsub.f32 %v196, %v199
  %v202 = vadd.f32 %v201, 1e-05
  %v203 = vrsqrt.pop %v202
  %v205 = vrot.slane %v203, 7
  %v207 = vmul.f32 %v21, %v205
  %v208 = vlaneseq
  %v209 = vshrl.u32 %v208, 7
  %v210 = vsub.s32 2, %v209
  %v211 = vrot.slane %v207, %v210
  %v212 = vmul.f32 %v17, %v211
  %v213 = vmul.f32 %v18, %v211
  %v214 = vmul.f32 %v19, %v211
  %v215 = vmul.f32 %v20, %v211
  %v217 = vrot.slane %v207, 2
  %v219 = vmul.f32 %v196, %v217
  %v221 = vrot.slane %v219, 5
  %v223 = vsub.f32 %v21, %v221
  %v224 = vlaneseq
  %v225 = vshrl.u32 %v224, 7
  %v226 = vsub.s32 3, %v225
  %v227 = vrot.slane %v223, %v226
  %v228 = vadd.f32 %v212, %v227
  %v229 = vadd.f32 %v213, %v227
  %v230 = vadd.f32 %v214, %v227
  %v231 = vadd.f32 %v215, %v227
  %v232 = vmax.f32 %v228, 0.0
  %v233 = vmax.f32 %v229, 0.0
  %v234 = vmax.f32 %v230, 0.0
  %v235 = vmax.f32 %v231, 0.0
  %v236 = vrot.slane %v232, 7
  %v237 = vrot.slane %v233, 7
  %v238 = vrot.slane %v234, 7
  %v239 = vrot.slane %v235, 7
  %vm240 = vcmp.lt.s32.totalorder %v23, 1
  %v241 = vsel %vm240, %v238, %v239
  %v242 = vsel %vm240, %v237, %v238
  %v243 = vsel %vm240, %v236, %v237
  %v244 = vsel %vm240, %v239, %v236
  %v245 = vmul.f32 %v39, %v244
  %v246 = vmul.f32 %v40, %v243
  %v247 = vmul.f32 %v41, %v242
  %v248 = vmul.f32 %v42, %v241
  %v249 = vrot.slane %v232, 1
  %v250 = vrot.slane %v233, 1
  %v251 = vrot.slane %v234, 1
  %v252 = vrot.slane %v235, 1
  %vm253 = vcmp.lt.s32.totalorder %v23, 7
  %v254 = vsel %vm253, %v251, %v252
  %v255 = vsel %vm253, %v250, %v251
  %v256 = vsel %vm253, %v249, %v250
  %v257 = vsel %vm253, %v252, %v249
  %v258 = vmul.f32 %v51, %v256
  %v259 = vmul.f32 %v52, %v255
  %v260 = vmul.f32 %v53, %v254
  %v261 = vmul.f32 %v54, %v257
  %s262 = scalar_lea.vmem %s2, 128
  %v263 = vld [vmem:[%s262] sm:$0xff]
  %v264 = vld [vmem:[%s262 + $0x8] sm:$0xff]
  %v265 = vld [vmem:[%s262 + $0x10] sm:$0xff]
  %v266 = vld [vmem:[%s262 + $0x18] sm:$0xff]
  %v267 = vld [vmem:[%s262 + $0x20] sm:$0xff]
  %v268 = vld [vmem:[%s262 + $0x28] sm:$0xff]
  %v269 = vld [vmem:[%s262 + $0x30] sm:$0xff]
  %v270 = vld [vmem:[%s262 + $0x38] sm:$0xff]
  %v271 = vld [vmem:[%s262 + $0x40] sm:$0xff]
  %v272 = vld [vmem:[%s262 + $0x48] sm:$0xff]
  %v273 = vld [vmem:[%s262 + $0x50] sm:$0xff]
  %v274 = vld [vmem:[%s262 + $0x58] sm:$0xff]
  %v275 = vld [vmem:[%s262 + $0x60] sm:$0xff]
  %v276 = vld [vmem:[%s262 + $0x68] sm:$0xff]
  %v277 = vld [vmem:[%s262 + $0x70] sm:$0xff]
  %v278 = vld [vmem:[%s262 + $0x78] sm:$0xff]
  %v279 = vld [vmem:[%s2] sm:$0xff]
  %v280 = vld [vmem:[%s2 + $0x8] sm:$0xff]
  %v281 = vld [vmem:[%s2 + $0x10] sm:$0xff]
  %v282 = vld [vmem:[%s2 + $0x18] sm:$0xff]
  %v283 = vld [vmem:[%s2 + $0x20] sm:$0xff]
  %v284 = vld [vmem:[%s2 + $0x28] sm:$0xff]
  %v285 = vld [vmem:[%s2 + $0x30] sm:$0xff]
  %v286 = vld [vmem:[%s2 + $0x38] sm:$0xff]
  %v287 = vld [vmem:[%s2 + $0x40] sm:$0xff]
  %v288 = vld [vmem:[%s2 + $0x48] sm:$0xff]
  %v289 = vld [vmem:[%s2 + $0x50] sm:$0xff]
  %v290 = vld [vmem:[%s2 + $0x58] sm:$0xff]
  %v291 = vld [vmem:[%s2 + $0x60] sm:$0xff]
  %v292 = vld [vmem:[%s2 + $0x68] sm:$0xff]
  %v293 = vld [vmem:[%s2 + $0x70] sm:$0xff]
  %v294 = vld [vmem:[%s2 + $0x78] sm:$0xff]
  %295 = vmatprep.subr.mxu0 0.0
  %296 = vmatpush1.msra.mxu0 %v294
  %297 = vmatprep.subr.mxu0 0.0
  %298 = vmatpush1.msra.mxu0 %v293
  %299 = vmatprep.subr.mxu0 0.0
  %300 = vmatpush1.msra.mxu0 %v292
  %301 = vmatprep.subr.mxu0 0.0
  %302 = vmatpush1.msra.mxu0 %v291
  %303 = vmatprep.subr.mxu0 0.0
  %304 = vmatpush1.msra.mxu0 %v290
  %305 = vmatprep.subr.mxu0 0.0
  %306 = vmatpush1.msra.mxu0 %v289
  %307 = vmatprep.subr.mxu0 0.0
  %308 = vmatpush1.msra.mxu0 %v288
  %309 = vmatprep.subr.mxu0 0.0
  %310 = vmatpush1.msra.mxu0 %v287
  %311 = vmatprep.subr.mxu0 0.0
  %312 = vmatpush1.msra.mxu0 %v286
  %313 = vmatprep.subr.mxu0 0.0
  %314 = vmatpush1.msra.mxu0 %v285
  %315 = vmatprep.subr.mxu0 0.0
  %316 = vmatpush1.msra.mxu0 %v284
  %317 = vmatprep.subr.mxu0 0.0
  %318 = vmatpush1.msra.mxu0 %v283
  %319 = vmatprep.subr.mxu0 0.0
  %320 = vmatpush1.msra.mxu0 %v282
  %321 = vmatprep.subr.mxu0 0.0
  %322 = vmatpush1.msra.mxu0 %v281
  %323 = vmatprep.subr.mxu0 0.0
  %324 = vmatpush1.msra.mxu0 %v280
  %325 = vmatprep.subr.mxu0 0.0
  %326 = vmatpush1.msra.mxu0 %v279
  %327 = vmatprep.subr.mxu0 0.0
  %328 = vmatpush2.msra.mxu0 0.0
  %329 = vmatprep.subr.mxu0 0.0
  %330 = vmatpush2.msra.mxu0 0.0
  %331 = vmatprep.subr.mxu0 0.0
  %332 = vmatpush2.msra.mxu0 0.0
  %333 = vmatprep.subr.mxu0 0.0
  %334 = vmatpush2.msra.mxu0 0.0
  %335 = vmatprep.subr.mxu0 0.0
  %336 = vmatpush2.msra.mxu0 0.0
  %337 = vmatprep.subr.mxu0 0.0
  %338 = vmatpush2.msra.mxu0 0.0
  %339 = vmatprep.subr.mxu0 0.0
  %340 = vmatpush2.msra.mxu0 0.0
  %341 = vmatprep.subr.mxu0 0.0
  %342 = vmatpush2.msra.mxu0 0.0
  %343 = vmatprep.subr.mxu0 0.0
  %344 = vmatpush2.msra.mxu0 0.0
  %345 = vmatprep.subr.mxu0 0.0
  %346 = vmatpush2.msra.mxu0 0.0
  %347 = vmatprep.subr.mxu0 0.0
  %348 = vmatpush2.msra.mxu0 0.0
  %349 = vmatprep.subr.mxu0 0.0
  %350 = vmatpush2.msra.mxu0 0.0
  %351 = vmatprep.subr.mxu0 0.0
  %352 = vmatpush2.msra.mxu0 0.0
  %353 = vmatprep.subr.mxu0 0.0
  %354 = vmatpush2.msra.mxu0 0.0
  %355 = vmatprep.subr.mxu0 0.0
  %356 = vmatpush2.msra.mxu0 0.0
  %357 = vmatprep.subr.mxu0 0.0
  %358 = vmatpush2.msra.mxu0 0.0
  %359 = vmatprep.mubr.f32.mxu0 0.0
  %360 = vmatmul.mubr.f32.gmra.mxu0 %v245
  %v361 = vpop.f32.mrf.mxu0
  %v362 = vadd.f32 0.0, %v361
  %v363 = vpop.f32.mrf.mxu0
  %364 = vmatprep.mubr.f32.mxu0 0.0
  %365 = vmatmul.mubr.f32.gmra.mxu0 %v246
  %v366 = vpop.f32.mrf.mxu0
  %v367 = vadd.f32 0.0, %v366
  %v368 = vpop.f32.mrf.mxu0
  %369 = vmatprep.mubr.f32.mxu0 0.0
  %370 = vmatmul.mubr.f32.gmra.mxu0 %v247
  %v371 = vpop.f32.mrf.mxu0
  %v372 = vadd.f32 0.0, %v371
  %v373 = vpop.f32.mrf.mxu0
  %374 = vmatprep.mubr.f32.mxu0 0.0
  %375 = vmatmul.mubr.f32.gmra.mxu0 %v248
  %v376 = vpop.f32.mrf.mxu0
  %v377 = vadd.f32 0.0, %v376
  %v378 = vpop.f32.mrf.mxu0
  %379 = vdwg.mxu0
  %380 = vmatprep.subr.mxu0 0.0
  %381 = vmatpush1.msra.mxu0 %v278
  %382 = vmatprep.subr.mxu0 0.0
  %383 = vmatpush1.msra.mxu0 %v277
  %384 = vmatprep.subr.mxu0 0.0
  %385 = vmatpush1.msra.mxu0 %v276
  %386 = vmatprep.subr.mxu0 0.0
  %387 = vmatpush1.msra.mxu0 %v275
  %388 = vmatprep.subr.mxu0 0.0
  %389 = vmatpush1.msra.mxu0 %v274
  %390 = vmatprep.subr.mxu0 0.0
  %391 = vmatpush1.msra.mxu0 %v273
  %392 = vmatprep.subr.mxu0 0.0
  %393 = vmatpush1.msra.mxu0 %v272
  %394 = vmatprep.subr.mxu0 0.0
  %395 = vmatpush1.msra.mxu0 %v271
  %396 = vmatprep.subr.mxu0 0.0
  %397 = vmatpush1.msra.mxu0 %v270
  %398 = vmatprep.subr.mxu0 0.0
  %399 = vmatpush1.msra.mxu0 %v269
  %400 = vmatprep.subr.mxu0 0.0
  %401 = vmatpush1.msra.mxu0 %v268
  %402 = vmatprep.subr.mxu0 0.0
  %403 = vmatpush1.msra.mxu0 %v267
  %404 = vmatprep.subr.mxu0 0.0
  %405 = vmatpush1.msra.mxu0 %v266
  %406 = vmatprep.subr.mxu0 0.0
  %407 = vmatpush1.msra.mxu0 %v265
  %408 = vmatprep.subr.mxu0 0.0
  %409 = vmatpush1.msra.mxu0 %v264
  %410 = vmatprep.subr.mxu0 0.0
  %411 = vmatpush1.msra.mxu0 %v263
  %412 = vmatprep.subr.mxu0 0.0
  %413 = vmatpush2.msra.mxu0 0.0
  %414 = vmatprep.subr.mxu0 0.0
  %415 = vmatpush2.msra.mxu0 0.0
  %416 = vmatprep.subr.mxu0 0.0
  %417 = vmatpush2.msra.mxu0 0.0
  %418 = vmatprep.subr.mxu0 0.0
  %419 = vmatpush2.msra.mxu0 0.0
  %420 = vmatprep.subr.mxu0 0.0
  %421 = vmatpush2.msra.mxu0 0.0
  %422 = vmatprep.subr.mxu0 0.0
  %423 = vmatpush2.msra.mxu0 0.0
  %424 = vmatprep.subr.mxu0 0.0
  %425 = vmatpush2.msra.mxu0 0.0
  %426 = vmatprep.subr.mxu0 0.0
  %427 = vmatpush2.msra.mxu0 0.0
  %428 = vmatprep.subr.mxu0 0.0
  %429 = vmatpush2.msra.mxu0 0.0
  %430 = vmatprep.subr.mxu0 0.0
  %431 = vmatpush2.msra.mxu0 0.0
  %432 = vmatprep.subr.mxu0 0.0
  %433 = vmatpush2.msra.mxu0 0.0
  %434 = vmatprep.subr.mxu0 0.0
  %435 = vmatpush2.msra.mxu0 0.0
  %436 = vmatprep.subr.mxu0 0.0
  %437 = vmatpush2.msra.mxu0 0.0
  %438 = vmatprep.subr.mxu0 0.0
  %439 = vmatpush2.msra.mxu0 0.0
  %440 = vmatprep.subr.mxu0 0.0
  %441 = vmatpush2.msra.mxu0 0.0
  %442 = vmatprep.subr.mxu0 0.0
  %443 = vmatpush2.msra.mxu0 0.0
  %444 = vmatprep.mubr.f32.mxu0 0.0
  %445 = vmatmul.mubr.f32.gmra.mxu0 %v232
  %v446 = vpop.f32.mrf.mxu0
  %v447 = vadd.f32 %v362, %v446
  %v448 = vpop.f32.mrf.mxu0
  %449 = vmatprep.mubr.f32.mxu0 0.0
  %450 = vmatmul.mubr.f32.gmra.mxu0 %v233
  %v451 = vpop.f32.mrf.mxu0
  %v452 = vadd.f32 %v367, %v451
  %v453 = vpop.f32.mrf.mxu0
  %454 = vmatprep.mubr.f32.mxu0 0.0
  %455 = vmatmul.mubr.f32.gmra.mxu0 %v234
  %v456 = vpop.f32.mrf.mxu0
  %v457 = vadd.f32 %v372, %v456
  %v458 = vpop.f32.mrf.mxu0
  %459 = vmatprep.mubr.f32.mxu0 0.0
  %460 = vmatmul.mubr.f32.gmra.mxu0 %v235
  %v461 = vpop.f32.mrf.mxu0
  %v462 = vadd.f32 %v377, %v461
  %v463 = vpop.f32.mrf.mxu0
  %464 = vdwg.mxu0
  %s465 = scalar_lea.vmem %s2, 256
  %v466 = vld [vmem:[%s465] sm:$0xff]
  %v467 = vld [vmem:[%s465 + $0x8] sm:$0xff]
  %v468 = vld [vmem:[%s465 + $0x10] sm:$0xff]
  %v469 = vld [vmem:[%s465 + $0x18] sm:$0xff]
  %v470 = vld [vmem:[%s465 + $0x20] sm:$0xff]
  %v471 = vld [vmem:[%s465 + $0x28] sm:$0xff]
  %v472 = vld [vmem:[%s465 + $0x30] sm:$0xff]
  %v473 = vld [vmem:[%s465 + $0x38] sm:$0xff]
  %v474 = vld [vmem:[%s465 + $0x40] sm:$0xff]
  %v475 = vld [vmem:[%s465 + $0x48] sm:$0xff]
  %v476 = vld [vmem:[%s465 + $0x50] sm:$0xff]
  %v477 = vld [vmem:[%s465 + $0x58] sm:$0xff]
  %v478 = vld [vmem:[%s465 + $0x60] sm:$0xff]
  %v479 = vld [vmem:[%s465 + $0x68] sm:$0xff]
  %v480 = vld [vmem:[%s465 + $0x70] sm:$0xff]
  %v481 = vld [vmem:[%s465 + $0x78] sm:$0xff]
  %482 = vmatprep.subr.mxu0 0.0
  %483 = vmatpush1.msra.mxu0 %v481
  %484 = vmatprep.subr.mxu0 0.0
  %485 = vmatpush1.msra.mxu0 %v480
  %486 = vmatprep.subr.mxu0 0.0
  %487 = vmatpush1.msra.mxu0 %v479
  %488 = vmatprep.subr.mxu0 0.0
  %489 = vmatpush1.msra.mxu0 %v478
  %490 = vmatprep.subr.mxu0 0.0
  %491 = vmatpush1.msra.mxu0 %v477
  %492 = vmatprep.subr.mxu0 0.0
  %493 = vmatpush1.msra.mxu0 %v476
  %494 = vmatprep.subr.mxu0 0.0
  %495 = vmatpush1.msra.mxu0 %v475
  %496 = vmatprep.subr.mxu0 0.0
  %497 = vmatpush1.msra.mxu0 %v474
  %498 = vmatprep.subr.mxu0 0.0
  %499 = vmatpush1.msra.mxu0 %v473
  %500 = vmatprep.subr.mxu0 0.0
  %501 = vmatpush1.msra.mxu0 %v472
  %502 = vmatprep.subr.mxu0 0.0
  %503 = vmatpush1.msra.mxu0 %v471
  %504 = vmatprep.subr.mxu0 0.0
  %505 = vmatpush1.msra.mxu0 %v470
  %506 = vmatprep.subr.mxu0 0.0
  %507 = vmatpush1.msra.mxu0 %v469
  %508 = vmatprep.subr.mxu0 0.0
  %509 = vmatpush1.msra.mxu0 %v468
  %510 = vmatprep.subr.mxu0 0.0
  %511 = vmatpush1.msra.mxu0 %v467
  %512 = vmatprep.subr.mxu0 0.0
  %513 = vmatpush1.msra.mxu0 %v466
  %514 = vmatprep.subr.mxu0 0.0
  %515 = vmatpush2.msra.mxu0 0.0
  %516 = vmatprep.subr.mxu0 0.0
  %517 = vmatpush2.msra.mxu0 0.0
  %518 = vmatprep.subr.mxu0 0.0
  %519 = vmatpush2.msra.mxu0 0.0
  %520 = vmatprep.subr.mxu0 0.0
  %521 = vmatpush2.msra.mxu0 0.0
  %522 = vmatprep.subr.mxu0 0.0
  %523 = vmatpush2.msra.mxu0 0.0
  %524 = vmatprep.subr.mxu0 0.0
  %525 = vmatpush2.msra.mxu0 0.0
  %526 = vmatprep.subr.mxu0 0.0
  %527 = vmatpush2.msra.mxu0 0.0
  %528 = vmatprep.subr.mxu0 0.0
  %529 = vmatpush2.msra.mxu0 0.0
  %530 = vmatprep.subr.mxu0 0.0
  %531 = vmatpush2.msra.mxu0 0.0
  %532 = vmatprep.subr.mxu0 0.0
  %533 = vmatpush2.msra.mxu0 0.0
  %534 = vmatprep.subr.mxu0 0.0
  %535 = vmatpush2.msra.mxu0 0.0
  %536 = vmatprep.subr.mxu0 0.0
  %537 = vmatpush2.msra.mxu0 0.0
  %538 = vmatprep.subr.mxu0 0.0
  %539 = vmatpush2.msra.mxu0 0.0
  %540 = vmatprep.subr.mxu0 0.0
  %541 = vmatpush2.msra.mxu0 0.0
  %542 = vmatprep.subr.mxu0 0.0
  %543 = vmatpush2.msra.mxu0 0.0
  %544 = vmatprep.subr.mxu0 0.0
  %545 = vmatpush2.msra.mxu0 0.0
  %546 = vmatprep.mubr.f32.mxu0 0.0
  %547 = vmatmul.mubr.f32.gmra.mxu0 %v258
  %v548 = vpop.f32.mrf.mxu0
  %v549 = vadd.f32 0.0, %v548
  %v550 = vpop.f32.mrf.mxu0
  %551 = vmatprep.mubr.f32.mxu0 0.0
  %552 = vmatmul.mubr.f32.gmra.mxu0 %v259
  %v553 = vpop.f32.mrf.mxu0
  %v554 = vadd.f32 0.0, %v553
  %v555 = vpop.f32.mrf.mxu0
  %556 = vmatprep.mubr.f32.mxu0 0.0
  %557 = vmatmul.mubr.f32.gmra.mxu0 %v260
  %v558 = vpop.f32.mrf.mxu0
  %v559 = vadd.f32 0.0, %v558
  %v560 = vpop.f32.mrf.mxu0
  %561 = vmatprep.mubr.f32.mxu0 0.0
  %562 = vmatmul.mubr.f32.gmra.mxu0 %v261
  %v563 = vpop.f32.mrf.mxu0
  %v564 = vadd.f32 0.0, %v563
  %v565 = vpop.f32.mrf.mxu0
  %566 = vdwg.mxu0
  %v567 = vadd.f32 %v447, %v549
  %v568 = vadd.f32 %v452, %v554
  %v569 = vadd.f32 %v457, %v559
  %v570 = vadd.f32 %v462, %v564
  %v571 = vadd.f32 %v567, %v568
  %v572 = vadd.f32 %v571, %v569
  %v573 = vadd.f32 %v572, %v570
  %v574 = vrot.slane %v573, 4
  %v575 = vadd.f32 %v573, %v574
  %v576 = vrot.slane %v575, 2
  %v577 = vadd.f32 %v575, %v576
  %v578 = vrot.slane %v577, 1
  %v579 = vadd.f32 %v577, %v578
  %v580 = vmul.f32 %v567, %v567
  %v581 = vmul.f32 %v568, %v568
  %v582 = vmul.f32 %v569, %v569
  %v583 = vmul.f32 %v570, %v570
  %v584 = vadd.f32 %v580, %v581
  %v585 = vadd.f32 %v584, %v582
  %v586 = vadd.f32 %v585, %v583
  %v587 = vrot.slane %v586, 4
  %v588 = vadd.f32 %v586, %v587
  %v589 = vrot.slane %v588, 2
  %v590 = vadd.f32 %v588, %v589
  %v591 = vrot.slane %v590, 1
  %v592 = vadd.f32 %v590, %v591
  %v593 = vsel %vm182, %v579, %v592
  %594 = vrot.lane.b32.xlu0 %v593, 8
  %v595 = vpop.permute.xlu0 %594
  %v596 = vadd.f32 %v593, %v595
  %597 = vrot.lane.b32.xlu0 %v596, 16
  %v598 = vpop.permute.xlu0 %597
  %v599 = vadd.f32 %v596, %v598
  %600 = vrot.lane.b32.xlu0 %v599, 32
  %v601 = vpop.permute.xlu0 %600
  %v602 = vadd.f32 %v599, %v601
  %603 = vrot.lane.b32.xlu0 %v602, 64
  %v604 = vpop.permute.xlu0 %603
  %v605 = vadd.f32 %v602, %v604
  %v606 = vmul.f32 %v605, 0.001953125
  %v607 = vmul.f32 %v606, %v606
  %v609 = vrot.slane %v607, 7
  %v611 = vsub.f32 %v606, %v609
  %v612 = vadd.f32 %v611, 1e-05
  %v613 = vrsqrt.pop %v612
  %v615 = vrot.slane %v613, 7
  %v617 = vmul.f32 %v21, %v615
  %v618 = vlaneseq
  %v619 = vshrl.u32 %v618, 7
  %v620 = vsub.s32 2, %v619
  %v621 = vrot.slane %v617, %v620
  %v622 = vmul.f32 %v567, %v621
  %v623 = vmul.f32 %v568, %v621
  %v624 = vmul.f32 %v569, %v621
  %v625 = vmul.f32 %v570, %v621
  %v627 = vrot.slane %v617, 2
  %v629 = vmul.f32 %v606, %v627
  %v631 = vrot.slane %v629, 5
  %v633 = vsub.f32 %v21, %v631
  %v634 = vlaneseq
  %v635 = vshrl.u32 %v634, 7
  %v636 = vsub.s32 3, %v635
  %v637 = vrot.slane %v633, %v636
  %v638 = vadd.f32 %v622, %v637
  %v639 = vadd.f32 %v623, %v637
  %v640 = vadd.f32 %v624, %v637
  %v641 = vadd.f32 %v625, %v637
  %v642 = vmax.f32 %v638, 0.0
  %v643 = vmax.f32 %v639, 0.0
  %v644 = vmax.f32 %v640, 0.0
  %v645 = vmax.f32 %v641, 0.0
  %v646 = vrot.slane %v642, 7
  %v647 = vrot.slane %v643, 7
  %v648 = vrot.slane %v644, 7
  %v649 = vrot.slane %v645, 7
  %v650 = vsel %vm240, %v648, %v649
  %v651 = vsel %vm240, %v647, %v648
  %v652 = vsel %vm240, %v646, %v647
  %v653 = vsel %vm240, %v649, %v646
  %v654 = vmul.f32 %v39, %v653
  %v655 = vmul.f32 %v40, %v652
  %v656 = vmul.f32 %v41, %v651
  %v657 = vmul.f32 %v42, %v650
  %v658 = vrot.slane %v642, 1
  %v659 = vrot.slane %v643, 1
  %v660 = vrot.slane %v644, 1
  %v661 = vrot.slane %v645, 1
  %v662 = vsel %vm253, %v660, %v661
  %v663 = vsel %vm253, %v659, %v660
  %v664 = vsel %vm253, %v658, %v659
  %v665 = vsel %vm253, %v661, %v658
  %v666 = vmul.f32 %v51, %v664
  %v667 = vmul.f32 %v52, %v663
  %v668 = vmul.f32 %v53, %v662
  %v669 = vmul.f32 %v54, %v665
  %670 = vmatprep.subr.mxu0 0.0
  %671 = vmatpush1.msra.mxu0 %v294
  %672 = vmatprep.subr.mxu0 0.0
  %673 = vmatpush1.msra.mxu0 %v293
  %674 = vmatprep.subr.mxu0 0.0
  %675 = vmatpush1.msra.mxu0 %v292
  %676 = vmatprep.subr.mxu0 0.0
  %677 = vmatpush1.msra.mxu0 %v291
  %678 = vmatprep.subr.mxu0 0.0
  %679 = vmatpush1.msra.mxu0 %v290
  %680 = vmatprep.subr.mxu0 0.0
  %681 = vmatpush1.msra.mxu0 %v289
  %682 = vmatprep.subr.mxu0 0.0
  %683 = vmatpush1.msra.mxu0 %v288
  %684 = vmatprep.subr.mxu0 0.0
  %685 = vmatpush1.msra.mxu0 %v287
  %686 = vmatprep.subr.mxu0 0.0
  %687 = vmatpush1.msra.mxu0 %v286
  %688 = vmatprep.subr.mxu0 0.0
  %689 = vmatpush1.msra.mxu0 %v285
  %690 = vmatprep.subr.mxu0 0.0
  %691 = vmatpush1.msra.mxu0 %v284
  %692 = vmatprep.subr.mxu0 0.0
  %693 = vmatpush1.msra.mxu0 %v283
  %694 = vmatprep.subr.mxu0 0.0
  %695 = vmatpush1.msra.mxu0 %v282
  %696 = vmatprep.subr.mxu0 0.0
  %697 = vmatpush1.msra.mxu0 %v281
  %698 = vmatprep.subr.mxu0 0.0
  %699 = vmatpush1.msra.mxu0 %v280
  %700 = vmatprep.subr.mxu0 0.0
  %701 = vmatpush1.msra.mxu0 %v279
  %702 = vmatprep.subr.mxu0 0.0
  %703 = vmatpush2.msra.mxu0 0.0
  %704 = vmatprep.subr.mxu0 0.0
  %705 = vmatpush2.msra.mxu0 0.0
  %706 = vmatprep.subr.mxu0 0.0
  %707 = vmatpush2.msra.mxu0 0.0
  %708 = vmatprep.subr.mxu0 0.0
  %709 = vmatpush2.msra.mxu0 0.0
  %710 = vmatprep.subr.mxu0 0.0
  %711 = vmatpush2.msra.mxu0 0.0
  %712 = vmatprep.subr.mxu0 0.0
  %713 = vmatpush2.msra.mxu0 0.0
  %714 = vmatprep.subr.mxu0 0.0
  %715 = vmatpush2.msra.mxu0 0.0
  %716 = vmatprep.subr.mxu0 0.0
  %717 = vmatpush2.msra.mxu0 0.0
  %718 = vmatprep.subr.mxu0 0.0
  %719 = vmatpush2.msra.mxu0 0.0
  %720 = vmatprep.subr.mxu0 0.0
  %721 = vmatpush2.msra.mxu0 0.0
  %722 = vmatprep.subr.mxu0 0.0
  %723 = vmatpush2.msra.mxu0 0.0
  %724 = vmatprep.subr.mxu0 0.0
  %725 = vmatpush2.msra.mxu0 0.0
  %726 = vmatprep.subr.mxu0 0.0
  %727 = vmatpush2.msra.mxu0 0.0
  %728 = vmatprep.subr.mxu0 0.0
  %729 = vmatpush2.msra.mxu0 0.0
  %730 = vmatprep.subr.mxu0 0.0
  %731 = vmatpush2.msra.mxu0 0.0
  %732 = vmatprep.subr.mxu0 0.0
  %733 = vmatpush2.msra.mxu0 0.0
  %734 = vmatprep.mubr.f32.mxu0 0.0
  %735 = vmatmul.mubr.f32.gmra.mxu0 %v654
  %v736 = vpop.f32.mrf.mxu0
  %v737 = vadd.f32 0.0, %v736
  %v738 = vpop.f32.mrf.mxu0
  %739 = vmatprep.mubr.f32.mxu0 0.0
  %740 = vmatmul.mubr.f32.gmra.mxu0 %v655
  %v741 = vpop.f32.mrf.mxu0
  %v742 = vadd.f32 0.0, %v741
  %v743 = vpop.f32.mrf.mxu0
  %744 = vmatprep.mubr.f32.mxu0 0.0
  %745 = vmatmul.mubr.f32.gmra.mxu0 %v656
  %v746 = vpop.f32.mrf.mxu0
  %v747 = vadd.f32 0.0, %v746
  %v748 = vpop.f32.mrf.mxu0
  %749 = vmatprep.mubr.f32.mxu0 0.0
  %750 = vmatmul.mubr.f32.gmra.mxu0 %v657
  %v751 = vpop.f32.mrf.mxu0
  %v752 = vadd.f32 0.0, %v751
  %v753 = vpop.f32.mrf.mxu0
  %754 = vdwg.mxu0
  %755 = vmatprep.subr.mxu0 0.0
  %756 = vmatpush1.msra.mxu0 %v278
  %757 = vmatprep.subr.mxu0 0.0
  %758 = vmatpush1.msra.mxu0 %v277
  %759 = vmatprep.subr.mxu0 0.0
  %760 = vmatpush1.msra.mxu0 %v276
  %761 = vmatprep.subr.mxu0 0.0
  %762 = vmatpush1.msra.mxu0 %v275
  %763 = vmatprep.subr.mxu0 0.0
  %764 = vmatpush1.msra.mxu0 %v274
  %765 = vmatprep.subr.mxu0 0.0
  %766 = vmatpush1.msra.mxu0 %v273
  %767 = vmatprep.subr.mxu0 0.0
  %768 = vmatpush1.msra.mxu0 %v272
  %769 = vmatprep.subr.mxu0 0.0
  %770 = vmatpush1.msra.mxu0 %v271
  %771 = vmatprep.subr.mxu0 0.0
  %772 = vmatpush1.msra.mxu0 %v270
  %773 = vmatprep.subr.mxu0 0.0
  %774 = vmatpush1.msra.mxu0 %v269
  %775 = vmatprep.subr.mxu0 0.0
  %776 = vmatpush1.msra.mxu0 %v268
  %777 = vmatprep.subr.mxu0 0.0
  %778 = vmatpush1.msra.mxu0 %v267
  %779 = vmatprep.subr.mxu0 0.0
  %780 = vmatpush1.msra.mxu0 %v266
  %781 = vmatprep.subr.mxu0 0.0
  %782 = vmatpush1.msra.mxu0 %v265
  %783 = vmatprep.subr.mxu0 0.0
  %784 = vmatpush1.msra.mxu0 %v264
  %785 = vmatprep.subr.mxu0 0.0
  %786 = vmatpush1.msra.mxu0 %v263
  %787 = vmatprep.subr.mxu0 0.0
  %788 = vmatpush2.msra.mxu0 0.0
  %789 = vmatprep.subr.mxu0 0.0
  %790 = vmatpush2.msra.mxu0 0.0
  %791 = vmatprep.subr.mxu0 0.0
  %792 = vmatpush2.msra.mxu0 0.0
  %793 = vmatprep.subr.mxu0 0.0
  %794 = vmatpush2.msra.mxu0 0.0
  %795 = vmatprep.subr.mxu0 0.0
  %796 = vmatpush2.msra.mxu0 0.0
  %797 = vmatprep.subr.mxu0 0.0
  %798 = vmatpush2.msra.mxu0 0.0
  %799 = vmatprep.subr.mxu0 0.0
  %800 = vmatpush2.msra.mxu0 0.0
  %801 = vmatprep.subr.mxu0 0.0
  %802 = vmatpush2.msra.mxu0 0.0
  %803 = vmatprep.subr.mxu0 0.0
  %804 = vmatpush2.msra.mxu0 0.0
  %805 = vmatprep.subr.mxu0 0.0
  %806 = vmatpush2.msra.mxu0 0.0
  %807 = vmatprep.subr.mxu0 0.0
  %808 = vmatpush2.msra.mxu0 0.0
  %809 = vmatprep.subr.mxu0 0.0
  %810 = vmatpush2.msra.mxu0 0.0
  %811 = vmatprep.subr.mxu0 0.0
  %812 = vmatpush2.msra.mxu0 0.0
  %813 = vmatprep.subr.mxu0 0.0
  %814 = vmatpush2.msra.mxu0 0.0
  %815 = vmatprep.subr.mxu0 0.0
  %816 = vmatpush2.msra.mxu0 0.0
  %817 = vmatprep.subr.mxu0 0.0
  %818 = vmatpush2.msra.mxu0 0.0
  %819 = vmatprep.mubr.f32.mxu0 0.0
  %820 = vmatmul.mubr.f32.gmra.mxu0 %v642
  %v821 = vpop.f32.mrf.mxu0
  %v822 = vadd.f32 %v737, %v821
  %v823 = vpop.f32.mrf.mxu0
  %824 = vmatprep.mubr.f32.mxu0 0.0
  %825 = vmatmul.mubr.f32.gmra.mxu0 %v643
  %v826 = vpop.f32.mrf.mxu0
  %v827 = vadd.f32 %v742, %v826
  %v828 = vpop.f32.mrf.mxu0
  %829 = vmatprep.mubr.f32.mxu0 0.0
  %830 = vmatmul.mubr.f32.gmra.mxu0 %v644
  %v831 = vpop.f32.mrf.mxu0
  %v832 = vadd.f32 %v747, %v831
  %v833 = vpop.f32.mrf.mxu0
  %834 = vmatprep.mubr.f32.mxu0 0.0
  %835 = vmatmul.mubr.f32.gmra.mxu0 %v645
  %v836 = vpop.f32.mrf.mxu0
  %v837 = vadd.f32 %v752, %v836
  %v838 = vpop.f32.mrf.mxu0
  %839 = vdwg.mxu0
  %840 = vmatprep.subr.mxu0 0.0
  %841 = vmatpush1.msra.mxu0 %v481
  %842 = vmatprep.subr.mxu0 0.0
  %843 = vmatpush1.msra.mxu0 %v480
  %844 = vmatprep.subr.mxu0 0.0
  %845 = vmatpush1.msra.mxu0 %v479
  %846 = vmatprep.subr.mxu0 0.0
  %847 = vmatpush1.msra.mxu0 %v478
  %848 = vmatprep.subr.mxu0 0.0
  %849 = vmatpush1.msra.mxu0 %v477
  %850 = vmatprep.subr.mxu0 0.0
  %851 = vmatpush1.msra.mxu0 %v476
  %852 = vmatprep.subr.mxu0 0.0
  %853 = vmatpush1.msra.mxu0 %v475
  %854 = vmatprep.subr.mxu0 0.0
  %855 = vmatpush1.msra.mxu0 %v474
  %856 = vmatprep.subr.mxu0 0.0
  %857 = vmatpush1.msra.mxu0 %v473
  %858 = vmatprep.subr.mxu0 0.0
  %859 = vmatpush1.msra.mxu0 %v472
  %860 = vmatprep.subr.mxu0 0.0
  %861 = vmatpush1.msra.mxu0 %v471
  %862 = vmatprep.subr.mxu0 0.0
  %863 = vmatpush1.msra.mxu0 %v470
  %864 = vmatprep.subr.mxu0 0.0
  %865 = vmatpush1.msra.mxu0 %v469
  %866 = vmatprep.subr.mxu0 0.0
  %867 = vmatpush1.msra.mxu0 %v468
  %868 = vmatprep.subr.mxu0 0.0
  %869 = vmatpush1.msra.mxu0 %v467
  %870 = vmatprep.subr.mxu0 0.0
  %871 = vmatpush1.msra.mxu0 %v466
  %872 = vmatprep.subr.mxu0 0.0
  %873 = vmatpush2.msra.mxu0 0.0
  %874 = vmatprep.subr.mxu0 0.0
  %875 = vmatpush2.msra.mxu0 0.0
  %876 = vmatprep.subr.mxu0 0.0
  %877 = vmatpush2.msra.mxu0 0.0
  %878 = vmatprep.subr.mxu0 0.0
  %879 = vmatpush2.msra.mxu0 0.0
  %880 = vmatprep.subr.mxu0 0.0
  %881 = vmatpush2.msra.mxu0 0.0
  %882 = vmatprep.subr.mxu0 0.0
  %883 = vmatpush2.msra.mxu0 0.0
  %884 = vmatprep.subr.mxu0 0.0
  %885 = vmatpush2.msra.mxu0 0.0
  %886 = vmatprep.subr.mxu0 0.0
  %887 = vmatpush2.msra.mxu0 0.0
  %888 = vmatprep.subr.mxu0 0.0
  %889 = vmatpush2.msra.mxu0 0.0
  %890 = vmatprep.subr.mxu0 0.0
  %891 = vmatpush2.msra.mxu0 0.0
  %892 = vmatprep.subr.mxu0 0.0
  %893 = vmatpush2.msra.mxu0 0.0
  %894 = vmatprep.subr.mxu0 0.0
  %895 = vmatpush2.msra.mxu0 0.0
  %896 = vmatprep.subr.mxu0 0.0
  %897 = vmatpush2.msra.mxu0 0.0
  %898 = vmatprep.subr.mxu0 0.0
  %899 = vmatpush2.msra.mxu0 0.0
  %900 = vmatprep.subr.mxu0 0.0
  %901 = vmatpush2.msra.mxu0 0.0
  %902 = vmatprep.subr.mxu0 0.0
  %903 = vmatpush2.msra.mxu0 0.0
  %904 = vmatprep.mubr.f32.mxu0 0.0
  %905 = vmatmul.mubr.f32.gmra.mxu0 %v666
  %v906 = vpop.f32.mrf.mxu0
  %v907 = vadd.f32 0.0, %v906
  %v908 = vpop.f32.mrf.mxu0
  %909 = vmatprep.mubr.f32.mxu0 0.0
  %910 = vmatmul.mubr.f32.gmra.mxu0 %v667
  %v911 = vpop.f32.mrf.mxu0
  %v912 = vadd.f32 0.0, %v911
  %v913 = vpop.f32.mrf.mxu0
  %914 = vmatprep.mubr.f32.mxu0 0.0
  %915 = vmatmul.mubr.f32.gmra.mxu0 %v668
  %v916 = vpop.f32.mrf.mxu0
  %v917 = vadd.f32 0.0, %v916
  %v918 = vpop.f32.mrf.mxu0
  %919 = vmatprep.mubr.f32.mxu0 0.0
  %920 = vmatmul.mubr.f32.gmra.mxu0 %v669
  %v921 = vpop.f32.mrf.mxu0
  %v922 = vadd.f32 0.0, %v921
  %v923 = vpop.f32.mrf.mxu0
  %924 = vdwg.mxu0
  %v925 = vadd.f32 %v822, %v907
  %v926 = vadd.f32 %v827, %v912
  %v927 = vadd.f32 %v832, %v917
  %v928 = vadd.f32 %v837, %v922
  %v929 = vlaneseq
  %v930 = vshrl.u32 %v929, 7
  %v931 = vsub.s32 1, %v930
  %v932 = vrot.slane %v21, %v931
  %v933 = vadd.f32 %v925, %v932
  %v934 = vadd.f32 %v926, %v932
  %v935 = vadd.f32 %v927, %v932
  %v936 = vadd.f32 %v928, %v932
  %v937 = vadd.f32 %v142, %v933
  %v938 = vadd.f32 %v147, %v934
  %v939 = vadd.f32 %v152, %v935
  %v940 = vadd.f32 %v157, %v936
  %941 = vst [vmem:[%s4] sm:$0xff] %v937
  %942 = vst [vmem:[%s4 + $0x8] sm:$0xff] %v938
  %943 = vst [vmem:[%s4 + $0x10] sm:$0xff] %v939
  %944 = vst [vmem:[%s4 + $0x18] sm:$0xff] %v940
  // Predicated region
  $region18: #{gblock_forward.1} parent=0 // pred_check
    _
  $region19: #{gblock_forward.1} parent=0 // pred_check_branch
    %946 = sbr.rel (0) target = $region21
  $region20: #{gblock_forward.1} parent=0 // pred_region
    _
  $region21: #{gblock_forward.1} parent=0 // pred_fallthru
    _
  // Predicated region
  $region22: #{gblock_forward.1} parent=0 // pred_check
    _
  $region23: #{gblock_forward.1} parent=0 // pred_check_branch
    %948 = sbr.rel (0) target = $region25
  $region24: #{gblock_forward.1} parent=0 // pred_region
    _
  $region25: #{gblock_forward.1} parent=0 // pred_fallthru
    _

</llo_original>
